<compile_context>
chip_gen: v5e
topology: v5e:2x2
jax: 0.10.0
libtpu: 0.0.40
codegen_flags: <defaults>
</compile_context>

<pallas_src>
import functools

import jax
import jax.numpy as jnp
from jax.experimental import pallas as pl
from jax.experimental.pallas import tpu as pltpu


def _round_up(n, m):
    return ((n + m - 1) // m) * m


def _pad2(a, rows, cols):
    r, c = a.shape
    if r == rows and c == cols:
        return a
    return jnp.pad(a, ((0, rows - r), (0, cols - c)))


@functools.lru_cache(maxsize=None)
def _single_buffer_supported():
    """Probe whether pipeline_mode=pl.Buffered(1) lowers on this JAX/TPU."""
    try:
        def k(x_ref, o_ref):
            o_ref[...] = x_ref[...] + 1.0

        x = jnp.zeros((8, 128), jnp.float32)
        out = pl.pallas_call(
            k,
            out_shape=jax.ShapeDtypeStruct((8, 128), jnp.float32),
            grid=(1,),
            in_specs=[pl.BlockSpec((8, 128), lambda i: (0, 0),
                                   pipeline_mode=pl.Buffered(1))],
            out_specs=pl.BlockSpec((8, 128), lambda i: (0, 0)),
        )(x)
        jax.block_until_ready(out)
        return True
    except Exception:
        return False


def _choose_batch_tiling(B, max_tile):
    """Pick (tm, Bp): sublane-aligned batch tile with low padding waste and,
    when possible, >=2 grid steps so v7x's second TensorCore gets work."""
    SUB = 8
    Bp0 = _round_up(B, SUB)
    max_tile = max(SUB, _round_up(max_tile, SUB))

    cands, t = [], max_tile
    while t > SUB:
        cands.append(t)
        t = max(SUB, _round_up(t // 2, SUB))
        if cands and t == cands[-1]:
            break
    cands.append(SUB)

    tm = SUB
    for t in cands:                               # largest tile, small waste
        Bp = _round_up(Bp0, t)
        if (Bp - B) <= max(0.125 * B, SUB):
            tm = t
            break
    Bp = _round_up(Bp0, tm)

    while Bp // tm < 2 and tm > SUB:              # megacore: >=2 grid steps
        tm = max(SUB, _round_up(tm // 2, SUB))
        Bp = _round_up(Bp0, tm)
    return tm, Bp


def _vmem_budget_bytes(tm, dims_p, compute_dtype, out_dtype, weight_bufs):
    cb = jnp.dtype(compute_dtype).itemsize
    ob = jnp.dtype(out_dtype).itemsize
    total = 2 * tm * dims_p[0] * cb               # x tile (double-buffered)
    total += 2 * tm * dims_p[-1] * ob             # out tile (double-buffered)
    for li in range(len(dims_p) - 1):
        total += weight_bufs * dims_p[li] * dims_p[li + 1] * cb   # weight
        total += weight_bufs * 8 * dims_p[li + 1] * 4             # bias (f32)
    dmax = max(dims_p)
    total += tm * dmax * (4 + cb)                 # live f32 acc + compute copy
    total += tm * dmax * 4                        # bias broadcast / temps
    # Generous headroom for compiler-internal scratch; stay under physical.
    return int(min(max(1.5 * total + (4 << 20), 8 << 20), 100 << 20))


def _make_mlp_kernel(reps_list, compute_dtype):
    """Kernel body. Refs: (x_ref, w0, b0, w1, b1, ..., o_ref).
    reps_list[i] = how many times unique layer i is applied (weight sharing);
    compile-time constants, so the loops fully unroll."""
    n_unique = len(reps_list)
    n_apps = sum(reps_list)

    def kernel(x_ref, *refs):
        o_ref = refs[-1]
        tm = x_ref.shape[0]
        h = x_ref[...]
        app = 0
        for li in range(n_unique):
            w = refs[2 * li][...]
            # Hoist the bias broadcast out of the reps loop (JAX does not CSE
            # broadcast_in_dim).  Bias stays f32; added post f32 accumulation.
            bb = jnp.broadcast_to(refs[2 * li + 1][...], (tm, w.shape[1]))
            for _ in range(reps_list[li]):
                app += 1
                acc = jnp.dot(h.astype(w.dtype), w,
                              preferred_element_type=jnp.float32) + bb
                # Final result stays f32 (output dtype); intermediates go back
                # to the bf16/f32 compute dtype for the next MXU pass.
                h = acc.astype(o_ref.dtype if app == n_apps else compute_dtype)
        o_ref[...] = h

    return kernel


def mlp_forward(x, layers, n_mid, *, compute_dtype=jnp.bfloat16,
                batch_tile=256):
    """Fused forward pass of the `mlp` module.

    x      : (B, n_input)
    layers : list of UNIQUE (w, b) pairs — [first] or [first, hidden, last];
             w is (in_features, out_features), b is (1, out_features).
    n_mid  : how many times the shared hidden layer is applied (n_layers - 2).
    """
    B, _ = x.shape
    Dout = layers[-1][0].shape[1]
    out_dtype = x.dtype

    # Expand weight sharing into (unique layer, reps); drop the shared hidden
    # layer entirely when n_mid == 0 (no wasted HBM->VMEM DMA or residency).
    layer_reps = []
    for li, lw in enumerate(layers):
        reps = n_mid if (len(layers) == 3 and li == 1) else 1
        if reps > 0:
            layer_reps.append((lw, reps))

    LANE = 128
    tm, Bp = _choose_batch_tiling(B, batch_tile)

    dims = [layer_reps[0][0][0].shape[0]] + [w.shape[1]
                                             for (w, _), _ in layer_reps]
    dims_p = [_round_up(d, LANE) for d in dims]

    x_p = _pad2(x, Bp, dims_p[0]).astype(compute_dtype)

    wb_kwargs = ({"pipeline_mode": pl.Buffered(1)}
                 if _single_buffer_supported() else {})
    weight_bufs = 1 if wb_kwargs else 2

    in_specs = [pl.BlockSpec((tm, dims_p[0]), lambda i: (i, 0))]
    args = [x_p]
    for li, ((w, b), _) in enumerate(layer_reps):
        wp = _pad2(w, dims_p[li], dims_p[li + 1]).astype(compute_dtype)
        bp = _pad2(b, 1, dims_p[li + 1]).astype(jnp.float32)   # bias stays f32
        # Constant block index -> DMA'd once, VMEM-resident (single-buffered).
        in_specs.append(pl.BlockSpec((dims_p[li], dims_p[li + 1]),
                                     lambda i: (0, 0), **wb_kwargs))
        in_specs.append(pl.BlockSpec((1, dims_p[li + 1]),
                                     lambda i: (0, 0), **wb_kwargs))
        args.extend([wp, bp])

    reps_list = tuple(r for _, r in layer_reps)
    kernel = _make_mlp_kernel(reps_list, compute_dtype)

    cbytes = jnp.dtype(compute_dtype).itemsize
    flops = sum(2 * Bp * dims_p[li] * dims_p[li + 1] * reps
                for li, (_, reps) in enumerate(layer_reps))
    bytes_accessed = (
        Bp * dims_p[0] * cbytes
        + Bp * dims_p[-1] * jnp.dtype(out_dtype).itemsize
        + sum(dims_p[li] * dims_p[li + 1] * cbytes + dims_p[li + 1] * 4
              for li in range(len(layer_reps))))
    cost = pl.CostEstimate(flops=flops, transcendentals=0,
                           bytes_accessed=bytes_accessed)

    vmem_limit = _vmem_budget_bytes(tm, dims_p, compute_dtype, out_dtype,
                                    weight_bufs)

    out_p = pl.pallas_call(
        kernel,
        out_shape=jax.ShapeDtypeStruct((Bp, dims_p[-1]), out_dtype),
        grid=(Bp // tm,),
        in_specs=in_specs,
        out_specs=pl.BlockSpec((tm, dims_p[-1]), lambda i: (i, 0)),
        compiler_params=pltpu.CompilerParams(
            dimension_semantics=("parallel",),
            vmem_limit_bytes=vmem_limit),
        cost_estimate=cost,
    )(*args)

    return out_p[:B, :Dout]


def init_mlp_params(key, n_layers, n_input, n_output, n_hidden=None,
                    dtype=jnp.float32):
    """Deterministic init mirroring the PyTorch module's shapes & sharing.

    Returns (unique_layers, n_mid): weights already transposed to (in, out),
    biases as (1, out).  kaiming_normal_ weights, default Linear bias init.
    """
    assert n_layers > 0
    if n_hidden is None:
        n_hidden = n_output

    def make_linear(k, fan_in, fan_out):
        kw, kb = jax.random.split(k)
        std = jnp.sqrt(2.0 / fan_in)
        w = (std * jax.random.normal(kw, (fan_in, fan_out))).astype(dtype)
        bound = 1.0 / jnp.sqrt(fan_in)
        b = jax.random.uniform(kb, (1, fan_out), dtype, -bound, bound)
        return w, b

    keys = jax.random.split(key, 3)
    if n_layers == 1:
        return [make_linear(keys[0], n_input, n_output)], 0
    first = make_linear(keys[0], n_input, n_hidden)
    hidden = make_linear(keys[1], n_hidden, n_hidden)   # shared (module reuse)
    last = make_linear(keys[2], n_hidden, n_output)
    return [first, hidden, last], n_layers - 2


def _reference(x, layers, n_mid):
    if len(layers) == 1:
        (w, b), = layers
        return x @ w + b
    (w1, b1), (wh, bh), (wl, bl) = layers
    h = x @ w1 + b1
    for _ in range(n_mid):
        h = h @ wh + bh
    return h @ wl + bl


if __name__ == "__main__":
    key = jax.random.PRNGKey(0)
    k_param, k_x = jax.random.split(key)

    n_layers, n_input, n_hidden, n_output = 4, 32, 32, 16
    batch = 8

    layers, n_mid = init_mlp_params(k_param, n_layers, n_input, n_output,
                                    n_hidden)
    x = jax.random.normal(k_x, (batch, n_input), jnp.float32)
    ref = _reference(x, layers, n_mid)

    # Default bf16 compute path (native MXU dtype), f32 accumulation.
    fwd_bf16 = jax.jit(lambda xx, ls: mlp_forward(xx, ls, n_mid))
    out_bf16 = jax.block_until_ready(fwd_bf16(x, layers))
    assert out_bf16.shape == (batch, n_output)
    assert jnp.allclose(out_bf16, ref, atol=3e-1, rtol=5e-2)

    # f32 compute path (exact check).
    fwd_f32 = jax.jit(
        lambda xx, ls: mlp_forward(xx, ls, n_mid, compute_dtype=jnp.float32))
    out_f32 = jax.block_until_ready(fwd_f32(x, layers))
    assert jnp.allclose(out_f32, ref, atol=1e-4, rtol=1e-4)

    # Multi-step batch grid + adaptive tiling (exercises padding slicing).
    xb = jax.random.normal(jax.random.PRNGKey(1), (40, n_input), jnp.float32)
    out_b = jax.block_until_ready(
        mlp_forward(xb, layers, n_mid, compute_dtype=jnp.float32,
                    batch_tile=16))
    assert out_b.shape == (40, n_output)
    assert jnp.allclose(out_b, _reference(xb, layers, n_mid),
                        atol=1e-4, rtol=1e-4)

    # n_layers == 2 path (n_mid == 0: shared hidden layer is dropped).
    layers2, n_mid2 = init_mlp_params(k_param, 2, n_input, n_output, n_hidden)
    out2 = jax.block_until_ready(
        mlp_forward(x, layers2, n_mid2, compute_dtype=jnp.float32))
    assert out2.shape == (batch, n_output)
    assert jnp.allclose(out2, _reference(x, layers2, n_mid2),
                        atol=1e-4, rtol=1e-4)

    # n_layers == 1 path (single Linear).
    layers1, n_mid1 = init_mlp_params(k_param, 1, n_input, n_output)
    out1 = jax.block_until_ready(
        mlp_forward(x, layers1, n_mid1, compute_dtype=jnp.float32))
    (w1, b1), = layers1
    assert out1.shape == (batch, n_output)
    assert jnp.allclose(out1, x @ w1 + b1, atol=1e-4, rtol=1e-4)

    print("KERNEL_OK")
</pallas_src>

<mosaic_0001>
module attributes {stable_mosaic.version = 11 : i64} {
  func.func @kernel(%arg0: i32, %arg1: memref<8x128xbf16, #tpu.memory_space<vmem>>, %arg2: memref<128x128xbf16, #tpu.memory_space<vmem>>, %arg3: memref<1x128xf32, #tpu.memory_space<vmem>>, %arg4: memref<128x128xbf16, #tpu.memory_space<vmem>>, %arg5: memref<1x128xf32, #tpu.memory_space<vmem>>, %arg6: memref<128x128xbf16, #tpu.memory_space<vmem>>, %arg7: memref<1x128xf32, #tpu.memory_space<vmem>>, %arg8: memref<8x128xf32, #tpu.memory_space<vmem>>) attributes {dimension_semantics = [#tpu.dimension_semantics<parallel>], iteration_bounds = array<i64: 1>, scalar_prefetch = 0 : i64, scratch_operands = 0 : i64, tpu.core_type = #tpu.core_type<tc>, window_params = [{transform_indices = @transform_0, window_bounds = array<i64: 8, 128>}, {pipeline_mode = #tpu.pipeline_mode<synchronous>, transform_indices = @transform_1, window_bounds = array<i64: 128, 128>}, {pipeline_mode = #tpu.pipeline_mode<synchronous>, transform_indices = @transform_2, window_bounds = array<i64: 1, 128>}, {pipeline_mode = #tpu.pipeline_mode<synchronous>, transform_indices = @transform_3, window_bounds = array<i64: 128, 128>}, {pipeline_mode = #tpu.pipeline_mode<synchronous>, transform_indices = @transform_4, window_bounds = array<i64: 1, 128>}, {pipeline_mode = #tpu.pipeline_mode<synchronous>, transform_indices = @transform_5, window_bounds = array<i64: 128, 128>}, {pipeline_mode = #tpu.pipeline_mode<synchronous>, transform_indices = @transform_6, window_bounds = array<i64: 1, 128>}, {transform_indices = @transform_7, window_bounds = array<i64: 8, 128>}]} {
    %c0 = arith.constant 0 : index
    %c0_0 = arith.constant 0 : index
    %0 = vector.load %arg1[%c0, %c0_0] : memref<8x128xbf16, #tpu.memory_space<vmem>>, vector<8x128xbf16>
    %c0_1 = arith.constant 0 : index
    %c0_2 = arith.constant 0 : index
    %1 = vector.load %arg2[%c0_1, %c0_2] : memref<128x128xbf16, #tpu.memory_space<vmem>>, vector<128x128xbf16>
    %c0_3 = arith.constant 0 : index
    %c0_4 = arith.constant 0 : index
    %2 = vector.load %arg3[%c0_3, %c0_4] : memref<1x128xf32, #tpu.memory_space<vmem>>, vector<1x128xf32>
    %3 = vector.shape_cast %2 : vector<1x128xf32> to vector<1x128xf32>
    %4 = vector.broadcast %3 : vector<1x128xf32> to vector<8x128xf32>
    %cst = arith.constant dense<0.000000e+00> : vector<8x128xf32>
    %5 = tpu.matmul %0, %1, %cst {dimension_numbers = #tpu.dot_dimension_numbers<[1], [0], [0], [1], [0, 0, 1, 1], [], []>} : vector<8x128xbf16>, vector<128x128xbf16>, vector<8x128xf32> -> vector<8x128xf32>
    %6 = arith.addf %5, %4 : vector<8x128xf32>
    %7 = arith.truncf %6 : vector<8x128xf32> to vector<8x128xbf16>
    %c0_5 = arith.constant 0 : index
    %c0_6 = arith.constant 0 : index
    %8 = vector.load %arg4[%c0_5, %c0_6] : memref<128x128xbf16, #tpu.memory_space<vmem>>, vector<128x128xbf16>
    %c0_7 = arith.constant 0 : index
    %c0_8 = arith.constant 0 : index
    %9 = vector.load %arg5[%c0_7, %c0_8] : memref<1x128xf32, #tpu.memory_space<vmem>>, vector<1x128xf32>
    %10 = vector.shape_cast %9 : vector<1x128xf32> to vector<1x128xf32>
    %11 = vector.broadcast %10 : vector<1x128xf32> to vector<8x128xf32>
    %cst_9 = arith.constant dense<0.000000e+00> : vector<8x128xf32>
    %12 = tpu.matmul %7, %8, %cst_9 {dimension_numbers = #tpu.dot_dimension_numbers<[1], [0], [0], [1], [0, 0, 1, 1], [], []>} : vector<8x128xbf16>, vector<128x128xbf16>, vector<8x128xf32> -> vector<8x128xf32>
    %13 = arith.addf %12, %11 : vector<8x128xf32>
    %14 = arith.truncf %13 : vector<8x128xf32> to vector<8x128xbf16>
    %cst_10 = arith.constant dense<0.000000e+00> : vector<8x128xf32>
    %15 = tpu.matmul %14, %8, %cst_10 {dimension_numbers = #tpu.dot_dimension_numbers<[1], [0], [0], [1], [0, 0, 1, 1], [], []>} : vector<8x128xbf16>, vector<128x128xbf16>, vector<8x128xf32> -> vector<8x128xf32>
    %16 = arith.addf %15, %11 : vector<8x128xf32>
    %17 = arith.truncf %16 : vector<8x128xf32> to vector<8x128xbf16>
    %c0_11 = arith.constant 0 : index
    %c0_12 = arith.constant 0 : index
    %18 = vector.load %arg6[%c0_11, %c0_12] : memref<128x128xbf16, #tpu.memory_space<vmem>>, vector<128x128xbf16>
    %c0_13 = arith.constant 0 : index
    %c0_14 = arith.constant 0 : index
    %19 = vector.load %arg7[%c0_13, %c0_14] : memref<1x128xf32, #tpu.memory_space<vmem>>, vector<1x128xf32>
    %20 = vector.shape_cast %19 : vector<1x128xf32> to vector<1x128xf32>
    %21 = vector.broadcast %20 : vector<1x128xf32> to vector<8x128xf32>
    %cst_15 = arith.constant dense<0.000000e+00> : vector<8x128xf32>
    %22 = tpu.matmul %17, %18, %cst_15 {dimension_numbers = #tpu.dot_dimension_numbers<[1], [0], [0], [1], [0, 0, 1, 1], [], []>} : vector<8x128xbf16>, vector<128x128xbf16>, vector<8x128xf32> -> vector<8x128xf32>
    %23 = arith.addf %22, %21 : vector<8x128xf32>
    %c0_16 = arith.constant 0 : index
    %c0_17 = arith.constant 0 : index
    %24 = vector.load %arg8[%c0_16, %c0_17] : memref<8x128xf32, #tpu.memory_space<vmem>>, vector<8x128xf32>
    tpu.vector_store %arg8[%c0_16, %c0_17], %23 {strides = array<i32>} : memref<8x128xf32, #tpu.memory_space<vmem>>, vector<8x128xf32>,
    return
  }
  func.func @transform_0(%arg0: i32) -> (i32, i32) {
    %c0_i32 = arith.constant 0 : i32
    %c0_i32_0 = arith.constant 0 : i32
    return %arg0, %c0_i32 : i32, i32
  }
  func.func @transform_1(%arg0: i32) -> (i32, i32) {
    %c0_i32 = arith.constant 0 : i32
    %c0_i32_0 = arith.constant 0 : i32
    %c0_i32_1 = arith.constant 0 : i32
    return %c0_i32, %c0_i32_0 : i32, i32
  }
  func.func @transform_2(%arg0: i32) -> (i32, i32) {
    %c0_i32 = arith.constant 0 : i32
    %c0_i32_0 = arith.constant 0 : i32
    %c0_i32_1 = arith.constant 0 : i32
    return %c0_i32, %c0_i32_0 : i32, i32
  }
  func.func @transform_3(%arg0: i32) -> (i32, i32) {
    %c0_i32 = arith.constant 0 : i32
    %c0_i32_0 = arith.constant 0 : i32
    %c0_i32_1 = arith.constant 0 : i32
    return %c0_i32, %c0_i32_0 : i32, i32
  }
  func.func @transform_4(%arg0: i32) -> (i32, i32) {
    %c0_i32 = arith.constant 0 : i32
    %c0_i32_0 = arith.constant 0 : i32
    %c0_i32_1 = arith.constant 0 : i32
    return %c0_i32, %c0_i32_0 : i32, i32
  }
  func.func @transform_5(%arg0: i32) -> (i32, i32) {
    %c0_i32 = arith.constant 0 : i32
    %c0_i32_0 = arith.constant 0 : i32
    %c0_i32_1 = arith.constant 0 : i32
    return %c0_i32, %c0_i32_0 : i32, i32
  }
  func.func @transform_6(%arg0: i32) -> (i32, i32) {
    %c0_i32 = arith.constant 0 : i32
    %c0_i32_0 = arith.constant 0 : i32
    %c0_i32_1 = arith.constant 0 : i32
    return %c0_i32, %c0_i32_0 : i32, i32
  }
  func.func @transform_7(%arg0: i32) -> (i32, i32) {
    %c0_i32 = arith.constant 0 : i32
    %c0_i32_0 = arith.constant 0 : i32
    return %arg0, %c0_i32 : i32, i32
  }
}

</mosaic_0001>

<llo_original>
// kernel: _lambda_.1
$region0: #{_lambda_.1}
  #allocation0 [shape = 'u32[]', space=smem, size = 0x4, offset = 0x4, fixed_abs, tag = 'smem constant byte address 0x4 - core index']
  #allocation1 [shape = 'u32[72,128]{1,0:T(1,128)}', space=vmem, size = 0x9000, scoped, tag = 'internal scratch']
  %s0 = inlined_call_operand.vmem [shape: bf16[8,128], index: 0, kind: input, shape index: {}]
  %s1 = inlined_call_operand.vmem [shape: bf16[128,128], index: 1, kind: input, shape index: {}]
  %s2 = inlined_call_operand.vmem [shape: f32[1,128], index: 2, kind: input, shape index: {}]
  %s3 = inlined_call_operand.vmem [shape: bf16[128,128], index: 3, kind: input, shape index: {}]
  %s4 = inlined_call_operand.vmem [shape: f32[1,128], index: 4, kind: input, shape index: {}]
  %s5 = inlined_call_operand.vmem [shape: bf16[128,128], index: 5, kind: input, shape index: {}]
  %s6 = inlined_call_operand.vmem [shape: f32[1,128], index: 6, kind: input, shape index: {}]
  %s7 = inlined_call_operand.hbm [shape: f32[8,128], index: 7, kind: output, shape index: {}]
  %s8 = sld [smem:[#allocation0]]
  $region38: #{_lambda_.1} parent=0
    _
  %s10 = ssub.s32 1, %s8
  %s11 = scalar_select 0, %s10, %s8
  $region1: #{_lambda_.1} parent=0
    #allocation2 [shape = 'u8[4096]{0}', space=vmem, size = 0x1000, scoped, tag = 'output window, operand 0, single buffered']
    #allocation3 [shape = 's32[1]{0}', space=sflag, size = 0x4, scoped, tag = 'scoped memory for _lambda_.1']
    %12 = vsyncpa [#allocation3], 0
    // Predicated region
    $region2: #{_lambda_.1} parent=1 // pred_check
      _
    $region3: #{_lambda_.1} parent=1 // pred_check_branch
      %14 = sbr.rel (0) target = $region5
    $region4: #{_lambda_.1} parent=1 // pred_region
      _
    $region5: #{_lambda_.1} parent=1 // pred_fallthru
      _
    // Predicated region
    $region6: #{_lambda_.1} parent=1 // pred_check
      _
    $region7: #{_lambda_.1} parent=1 // pred_check_branch
      %16 = sbr.rel (0) target = $region9
    $region8: #{_lambda_.1} parent=1 // pred_region
      _
    $region9: #{_lambda_.1} parent=1 // pred_fallthru
      _
    // Predicated region
    $region10: #{_lambda_.1} parent=1 // pred_check
      _
    $region11: #{_lambda_.1} parent=1 // pred_check_branch
      %18 = sbr.rel (0) target = $region13
    $region12: #{_lambda_.1} parent=1 // pred_region
      _
    $region13: #{_lambda_.1} parent=1 // pred_fallthru
      _
    // Predicated region
    $region14: #{_lambda_.1} parent=1 // pred_check
      _
    $region15: #{_lambda_.1} parent=1 // pred_check_branch
      %20 = sbr.rel (0) target = $region17
    $region16: #{_lambda_.1} parent=1 // pred_region
      _
    $region17: #{_lambda_.1} parent=1 // pred_fallthru
      _
    // Predicated region
    $region18: #{_lambda_.1} parent=1 // pred_check
      _
    $region19: #{_lambda_.1} parent=1 // pred_check_branch
      %22 = sbr.rel (0) target = $region21
    $region20: #{_lambda_.1} parent=1 // pred_region
      _
    $region21: #{_lambda_.1} parent=1 // pred_fallthru
      _
    // Predicated region
    $region22: #{_lambda_.1} parent=1 // pred_check
      _
    $region23: #{_lambda_.1} parent=1 // pred_check_branch
      %24 = sbr.rel (0) target = $region25
    $region24: #{_lambda_.1} parent=1 // pred_region
      _
    $region25: #{_lambda_.1} parent=1 // pred_fallthru
      _
    // Predicated region
    $region26: #{_lambda_.1} parent=1 // pred_check
      _
    $region27: #{_lambda_.1} parent=1 // pred_check_branch
      %26 = sbr.rel (0) target = $region29
    $region28: #{_lambda_.1} parent=1 // pred_region
      _
    $region29: #{_lambda_.1} parent=1 // pred_fallthru
      _
    %v27 = vld [vmem:[%s0] sm:$0xf]
    %v28 = vld [vmem:[%s1] sm:$0xf]
    %v29 = vld [vmem:[%s1 + $0x4] sm:$0xf]
    %v30 = vld [vmem:[%s1 + $0x8] sm:$0xf]
    %v31 = vld [vmem:[%s1 + $0xc] sm:$0xf]
    %v32 = vld [vmem:[%s1 + $0x10] sm:$0xf]
    %v33 = vld [vmem:[%s1 + $0x14] sm:$0xf]
    %v34 = vld [vmem:[%s1 + $0x18] sm:$0xf]
    %v35 = vld [vmem:[%s1 + $0x1c] sm:$0xf]
    %v36 = vld [vmem:[%s1 + $0x20] sm:$0xf]
    %v37 = vld [vmem:[%s1 + $0x24] sm:$0xf]
    %v38 = vld [vmem:[%s1 + $0x28] sm:$0xf]
    %v39 = vld [vmem:[%s1 + $0x2c] sm:$0xf]
    %v40 = vld [vmem:[%s1 + $0x30] sm:$0xf]
    %v41 = vld [vmem:[%s1 + $0x34] sm:$0xf]
    %v42 = vld [vmem:[%s1 + $0x38] sm:$0xf]
    %v43 = vld [vmem:[%s1 + $0x3c] sm:$0xf]
    %v44 = vld [vmem:[%s2] sm:$0x1]
    %v46 = vperm.slane %v44, 0
    %v64 = vunpack.c.l.b16 %v28
    %v65 = vunpack.c.l.b16 %v29
    %v66 = vunpack.c.l.b16 %v30
    %v67 = vunpack.c.l.b16 %v31
    %v68 = vunpack.c.l.b16 %v32
    %v69 = vunpack.c.l.b16 %v33
    %v70 = vunpack.c.l.b16 %v34
    %v71 = vunpack.c.l.b16 %v35
    %v72 = vunpack.c.l.b16 %v36
    %v73 = vunpack.c.l.b16 %v37
    %v74 = vunpack.c.l.b16 %v38
    %v75 = vunpack.c.l.b16 %v39
    %v76 = vunpack.c.l.b16 %v40
    %v77 = vunpack.c.l.b16 %v41
    %v78 = vunpack.c.l.b16 %v42
    %v79 = vunpack.c.l.b16 %v43
    %v80 = vpack.c.b16 %v65, %v64
    %v81 = vpack.c.b16 %v67, %v66
    %v82 = vpack.c.b16 %v69, %v68
    %v83 = vpack.c.b16 %v71, %v70
    %v84 = vpack.c.b16 %v73, %v72
    %v85 = vpack.c.b16 %v75, %v74
    %v86 = vpack.c.b16 %v77, %v76
    %v87 = vpack.c.b16 %v79, %v78
    %96 = vmatpush.bf16.msra.mxu0 %v87
    %97 = vmatpush.bf16.msra.mxu0 %v86
    %98 = vmatpush.bf16.msra.mxu0 %v85
    %99 = vmatpush.bf16.msra.mxu0 %v84
    %100 = vmatpush.bf16.msra.mxu0 %v83
    %101 = vmatpush.bf16.msra.mxu0 %v82
    %102 = vmatpush.bf16.msra.mxu0 %v81
    %103 = vmatpush.bf16.msra.mxu0 %v80
    %104 = vmatmul.bf16.gmra.mxu0 %v27
    %v105 = vpop.f32.mrf.mxu0
    %v106 = vadd.f32 %v46, %v105
    %v107 = vpop.f32.mrf.mxu0
    %108 = vdwg.mxu0
    %v109 = vpack.c.bf16 %v106, %v106
    %v110 = vld [vmem:[%s3] sm:$0xf]
    %v111 = vld [vmem:[%s3 + $0x4] sm:$0xf]
    %v112 = vld [vmem:[%s3 + $0x8] sm:$0xf]
    %v113 = vld [vmem:[%s3 + $0xc] sm:$0xf]
    %v114 = vld [vmem:[%s3 + $0x10] sm:$0xf]
    %v115 = vld [vmem:[%s3 + $0x14] sm:$0xf]
    %v116 = vld [vmem:[%s3 + $0x18] sm:$0xf]
    %v117 = vld [vmem:[%s3 + $0x1c] sm:$0xf]
    %v118 = vld [vmem:[%s3 + $0x20] sm:$0xf]
    %v119 = vld [vmem:[%s3 + $0x24] sm:$0xf]
    %v120 = vld [vmem:[%s3 + $0x28] sm:$0xf]
    %v121 = vld [vmem:[%s3 + $0x2c] sm:$0xf]
    %v122 = vld [vmem:[%s3 + $0x30] sm:$0xf]
    %v123 = vld [vmem:[%s3 + $0x34] sm:$0xf]
    %v124 = vld [vmem:[%s3 + $0x38] sm:$0xf]
    %v125 = vld [vmem:[%s3 + $0x3c] sm:$0xf]
    %v126 = vld [vmem:[%s4] sm:$0x1]
    %v128 = vperm.slane %v126, 0
    %v146 = vunpack.c.l.b16 %v110
    %v147 = vunpack.c.l.b16 %v111
    %v148 = vunpack.c.l.b16 %v112
    %v149 = vunpack.c.l.b16 %v113
    %v150 = vunpack.c.l.b16 %v114
    %v151 = vunpack.c.l.b16 %v115
    %v152 = vunpack.c.l.b16 %v116
    %v153 = vunpack.c.l.b16 %v117
    %v154 = vunpack.c.l.b16 %v118
    %v155 = vunpack.c.l.b16 %v119
    %v156 = vunpack.c.l.b16 %v120
    %v157 = vunpack.c.l.b16 %v121
    %v158 = vunpack.c.l.b16 %v122
    %v159 = vunpack.c.l.b16 %v123
    %v160 = vunpack.c.l.b16 %v124
    %v161 = vunpack.c.l.b16 %v125
    %v162 = vpack.c.b16 %v147, %v146
    %v163 = vpack.c.b16 %v149, %v148
    %v164 = vpack.c.b16 %v151, %v150
    %v165 = vpack.c.b16 %v153, %v152
    %v166 = vpack.c.b16 %v155, %v154
    %v167 = vpack.c.b16 %v157, %v156
    %v168 = vpack.c.b16 %v159, %v158
    %v169 = vpack.c.b16 %v161, %v160
    %178 = vmatpush.bf16.msra.mxu0 %v169
    %179 = vmatpush.bf16.msra.mxu0 %v168
    %180 = vmatpush.bf16.msra.mxu0 %v167
    %181 = vmatpush.bf16.msra.mxu0 %v166
    %182 = vmatpush.bf16.msra.mxu0 %v165
    %183 = vmatpush.bf16.msra.mxu0 %v164
    %184 = vmatpush.bf16.msra.mxu0 %v163
    %185 = vmatpush.bf16.msra.mxu0 %v162
    %186 = vmatmul.bf16.gmra.mxu0 %v109
    %v187 = vpop.f32.mrf.mxu0
    %v188 = vadd.f32 %v128, %v187
    %v189 = vpop.f32.mrf.mxu0
    %190 = vdwg.mxu0
    %v191 = vpack.c.bf16 %v188, %v188
    %192 = vmatpush.bf16.msra.mxu0 %v169
    %193 = vmatpush.bf16.msra.mxu0 %v168
    %194 = vmatpush.bf16.msra.mxu0 %v167
    %195 = vmatpush.bf16.msra.mxu0 %v166
    %196 = vmatpush.bf16.msra.mxu0 %v165
    %197 = vmatpush.bf16.msra.mxu0 %v164
    %198 = vmatpush.bf16.msra.mxu0 %v163
    %199 = vmatpush.bf16.msra.mxu0 %v162
    %200 = vmatmul.bf16.gmra.mxu0 %v191
    %v201 = vpop.f32.mrf.mxu0
    %v202 = vadd.f32 %v128, %v201
    %v203 = vpop.f32.mrf.mxu0
    %204 = vdwg.mxu0
    %v205 = vpack.c.bf16 %v202, %v202
    %v206 = vld [vmem:[%s5] sm:$0xf]
    %v207 = vld [vmem:[%s5 + $0x4] sm:$0xf]
    %v208 = vld [vmem:[%s5 + $0x8] sm:$0xf]
    %v209 = vld [vmem:[%s5 + $0xc] sm:$0xf]
    %v210 = vld [vmem:[%s5 + $0x10] sm:$0xf]
    %v211 = vld [vmem:[%s5 + $0x14] sm:$0xf]
    %v212 = vld [vmem:[%s5 + $0x18] sm:$0xf]
    %v213 = vld [vmem:[%s5 + $0x1c] sm:$0xf]
    %v214 = vld [vmem:[%s5 + $0x20] sm:$0xf]
    %v215 = vld [vmem:[%s5 + $0x24] sm:$0xf]
    %v216 = vld [vmem:[%s5 + $0x28] sm:$0xf]
    %v217 = vld [vmem:[%s5 + $0x2c] sm:$0xf]
    %v218 = vld [vmem:[%s5 + $0x30] sm:$0xf]
    %v219 = vld [vmem:[%s5 + $0x34] sm:$0xf]
    %v220 = vld [vmem:[%s5 + $0x38] sm:$0xf]
    %v221 = vld [vmem:[%s5 + $0x3c] sm:$0xf]
    %v222 = vld [vmem:[%s6] sm:$0x1]
    %v224 = vperm.slane %v222, 0
    %v242 = vunpack.c.l.b16 %v206
    %v243 = vunpack.c.l.b16 %v207
    %v244 = vunpack.c.l.b16 %v208
    %v245 = vunpack.c.l.b16 %v209
    %v246 = vunpack.c.l.b16 %v210
    %v247 = vunpack.c.l.b16 %v211
    %v248 = vunpack.c.l.b16 %v212
    %v249 = vunpack.c.l.b16 %v213
    %v250 = vunpack.c.l.b16 %v214
    %v251 = vunpack.c.l.b16 %v215
    %v252 = vunpack.c.l.b16 %v216
    %v253 = vunpack.c.l.b16 %v217
    %v254 = vunpack.c.l.b16 %v218
    %v255 = vunpack.c.l.b16 %v219
    %v256 = vunpack.c.l.b16 %v220
    %v257 = vunpack.c.l.b16 %v221
    %v258 = vpack.c.b16 %v243, %v242
    %v259 = vpack.c.b16 %v245, %v244
    %v260 = vpack.c.b16 %v247, %v246
    %v261 = vpack.c.b16 %v249, %v248
    %v262 = vpack.c.b16 %v251, %v250
    %v263 = vpack.c.b16 %v253, %v252
    %v264 = vpack.c.b16 %v255, %v254
    %v265 = vpack.c.b16 %v257, %v256
    %274 = vmatpush.bf16.msra.mxu0 %v265
    %275 = vmatpush.bf16.msra.mxu0 %v264
    %276 = vmatpush.bf16.msra.mxu0 %v263
    %277 = vmatpush.bf16.msra.mxu0 %v262
    %278 = vmatpush.bf16.msra.mxu0 %v261
    %279 = vmatpush.bf16.msra.mxu0 %v260
    %280 = vmatpush.bf16.msra.mxu0 %v259
    %281 = vmatpush.bf16.msra.mxu0 %v258
    %282 = vmatmul.bf16.gmra.mxu0 %v205
    %v283 = vpop.f32.mrf.mxu0
    %v284 = vadd.f32 %v224, %v283
    %v285 = vpop.f32.mrf.mxu0
    %286 = vdwg.mxu0
    %287 = vst [vmem:[#allocation2] sm:$0xff] %v284
    // Predicated region
    $region30: #{_lambda_.1} parent=1 // pred_check
      _
    $region31: #{_lambda_.1} parent=1 // pred_check_branch
      %289 = sbr.rel (0) target = $region33
    $region32: #{_lambda_.1} parent=1 // pred_region
      %291 = vsyncadd [#allocation3], 0
      %s293 = sshll.u32 [#allocation2], 4
      %s294 = int_to_ptr.vmem [resolvable:$true] %s293
      %s295 = sshll.u32 %s7, 4
      %s296 = int_to_ptr.hbm [resolvable:$true] %s295
      %298 = dma.vmem_to_hbm [thread:$0]  %s294, 128, %s296, [#allocation3]
    $region33: #{_lambda_.1} parent=1 // pred_fallthru
      _
    // Predicated region
    $region34: #{_lambda_.1} parent=1 // pred_check
      _
    $region35: #{_lambda_.1} parent=1 // pred_check_branch
      %300 = sbr.rel (0) target = $region37
    $region36: #{_lambda_.1} parent=1 // pred_region
      %302 = dma.done [#allocation3], 128
    $region37: #{_lambda_.1} parent=1 // pred_fallthru
      _
    %303 = vsyncpa [#allocation3], 1

</llo_original>
